<compile_context>
chip_gen: v6e
topology: v6e:2x2x1
jax: 0.10.0
libtpu: 0.0.40
codegen_flags: <defaults>
</compile_context>

<pallas_src>
import jax
import jax.numpy as jnp
from jax import lax
from jax.experimental import pallas as pl
from jax.experimental.pallas import tpu as pltpu

_SMALL_B_THRESHOLD = 256   # below this, a grid is pure overhead
_TM = 128                  # batch tile for the large-B gridded path


def _add1_linear_kernel(x_ref, w_ref, o_ref):
    # x_ref: (tm, K) f32, w_ref: (K, N) f32 (pre-transposed at init), o_ref: (tm, N) f32.
    x = x_ref[...] + 1.0                               # TestModule: out + 1 (VPU, hidden under MXU)
    o_ref[...] = jnp.dot(                              # native MXU (M,K)x(K,N) path
        x, w_ref[...], preferred_element_type=jnp.float32
    ).astype(o_ref.dtype)


def prepare_linear_weight(linear_weight_pt):
    """One-time, init/param-load-time conversion of the PyTorch nn.Linear weight
    (out_features, in_features) = (N, K) into the kernel's (K, N) layout.
    Do NOT call this inside the jitted per-call path."""
    return jnp.asarray(linear_weight_pt).T.copy()


def test_model_forward(x_nchw, w_kn):
    """x_nchw: (B, C, H, W) with C*H*W == 300.
    w_kn: (300, 300) pre-transposed weight, (in_features, out_features) layout.
    Returns (B, 300) == (x.view(B, -1) + 1) @ W.T (PyTorch convention)."""
    B = x_nchw.shape[0]
    x_flat = x_nchw.reshape(B, -1)        # identity "conv" + .view(B, -1)
    K, N = w_kn.shape

    cost = pl.CostEstimate(
        flops=2 * B * K * N,
        transcendentals=0,
        bytes_accessed=4 * (B * K + K * N + B * N),
    )

    if B <= _SMALL_B_THRESHOLD:
        # Tiny problem: single invocation, no grid, whole operands VMEM-resident
        # (~0.7 MB at B=2, far under any generation's VMEM cap).
        return pl.pallas_call(
            _add1_linear_kernel,
            out_shape=jax.ShapeDtypeStruct((B, N), x_flat.dtype),
            in_specs=[
                pl.BlockSpec(memory_space=pltpu.MemorySpace.VMEM),
                pl.BlockSpec(memory_space=pltpu.MemorySpace.VMEM),
            ],
            out_specs=pl.BlockSpec(memory_space=pltpu.MemorySpace.VMEM),
            cost_estimate=cost,
        )(x_flat, w_kn)

    # Large-B path: tile the batch, keep the weight VMEM-resident (index_map
    # pinned to (0,0) -> one weight DMA per call), pipeline x/out DMA under the
    # MXU, and let the parallel batch axis shard across TensorCores on v7x.
    tm = _TM
    n_blocks = pl.cdiv(B, tm)
    b_pad = n_blocks * tm
    if b_pad != B:
        x_flat = jnp.pad(x_flat, ((0, b_pad - B), (0, 0)))

    out = pl.pallas_call(
        _add1_linear_kernel,
        out_shape=jax.ShapeDtypeStruct((b_pad, N), x_flat.dtype),
        grid=(n_blocks,),
        in_specs=[
            pl.BlockSpec((tm, K), lambda i: (i, 0)),
            pl.BlockSpec((K, N), lambda i: (0, 0)),   # weight: same block every step
        ],
        out_specs=pl.BlockSpec((tm, N), lambda i: (i, 0)),
        compiler_params=pltpu.CompilerParams(dimension_semantics=("parallel",)),
        cost_estimate=cost,
    )(x_flat, w_kn)
    return out[:B]


if __name__ == "__main__":
    key = jax.random.PRNGKey(0)
    k_x, k_w = jax.random.split(key)

    # Input consistent with the forward: flatten to 300 features -> (B, 3, 10, 10).
    B, C, H, W = 2, 3, 10, 10
    x = jax.random.normal(k_x, (B, C, H, W), dtype=jnp.float32)

    # nn.Linear(300, 300, bias=False) weight, PyTorch (out_features, in_features).
    linear_w = jax.random.normal(k_w, (300, 300), dtype=jnp.float32) * 0.05

    # One-time, init-time layout fix (outside the jitted per-call path).
    w_kn = prepare_linear_weight(linear_w)

    fwd = jax.jit(test_model_forward)

    # --- small-B (no-grid) path, the TestModel regime ---
    out = jax.block_until_ready(fwd(x, w_kn))
    ref = jnp.dot(x.reshape(B, -1) + 1.0, linear_w.T,
                  precision=lax.Precision.HIGHEST)
    assert out.shape == (B, 300), out.shape
    assert jnp.allclose(out, ref, atol=1e-4, rtol=1e-4), "small-B mismatch vs reference"

    # --- large-B (gridded, batch-amortized) path ---
    BL = 300  # not a multiple of the 128 batch tile -> also exercises padding
    xl = jax.random.normal(jax.random.PRNGKey(1), (BL, C, H, W), dtype=jnp.float32)
    out_l = jax.block_until_ready(fwd(xl, w_kn))
    ref_l = jnp.dot(xl.reshape(BL, -1) + 1.0, linear_w.T,
                    precision=lax.Precision.HIGHEST)
    assert out_l.shape == (BL, 300), out_l.shape
    assert jnp.allclose(out_l, ref_l, atol=1e-4, rtol=1e-4), "large-B mismatch vs reference"

    print("KERNEL_OK")
</pallas_src>

<mosaic_0001>
module attributes {stable_mosaic.version = 11 : i64} {
  func.func @_add1_linear_kernel(%arg0: memref<2x300xf32, #tpu.memory_space<vmem>>, %arg1: memref<300x300xf32, #tpu.memory_space<vmem>>, %arg2: memref<2x300xf32, #tpu.memory_space<vmem>>) attributes {dimension_semantics = [], scalar_prefetch = 0 : i64, scratch_operands = 0 : i64, tpu.core_type = #tpu.core_type<tc>} {
    %c0 = arith.constant 0 : index
    %c0_0 = arith.constant 0 : index
    %0 = vector.load %arg0[%c0, %c0_0] : memref<2x300xf32, #tpu.memory_space<vmem>>, vector<2x300xf32>
    %cst = arith.constant 1.000000e+00 : f32
    %1 = vector.broadcast %cst : f32 to vector<2x300xf32>
    %2 = arith.addf %0, %1 : vector<2x300xf32>
    %c0_1 = arith.constant 0 : index
    %c0_2 = arith.constant 0 : index
    %3 = vector.load %arg1[%c0_1, %c0_2] : memref<300x300xf32, #tpu.memory_space<vmem>>, vector<300x300xf32>
    %cst_3 = arith.constant dense<0.000000e+00> : vector<2x300xf32>
    %4 = tpu.matmul %2, %3, %cst_3 {dimension_numbers = #tpu.dot_dimension_numbers<[1], [0], [0], [1], [0, 0, 1, 1], [], []>} : vector<2x300xf32>, vector<300x300xf32>, vector<2x300xf32> -> vector<2x300xf32>
    %c0_4 = arith.constant 0 : index
    %c0_5 = arith.constant 0 : index
    %5 = vector.load %arg2[%c0_4, %c0_5] : memref<2x300xf32, #tpu.memory_space<vmem>>, vector<2x300xf32>
    tpu.vector_store %arg2[%c0_4, %c0_5], %4 {strides = array<i32>} : memref<2x300xf32, #tpu.memory_space<vmem>>, vector<2x300xf32>,
    return
  }
}

</mosaic_0001>

<llo_original>
// kernel: test_model_forward.1
$region0: #{test_model_forward.1}
  #allocation0 [shape = 'u32[]', space=smem, size = 0x4, offset = 0x4, fixed_abs, tag = 'smem constant byte address 0x4 - core index']
  #allocation1 [shape = 'u32[144,128]{1,0:T(1,128)}', space=vmem, size = 0x12000, scoped, tag = 'internal scratch']
  %s0 = inlined_call_operand.vmem [shape: f32[2,300], index: 0, kind: input, shape index: {}]
  %s1 = inlined_call_operand.hbm [shape: f32[300,300], index: 1, kind: input, shape index: {}]
  %s2 = inlined_call_operand.hbm [shape: f32[2,300], index: 2, kind: output, shape index: {}]
  %s3 = sld [smem:[#allocation0]]
  $region22: #{test_model_forward.1} parent=0
    _
  %s5 = ssub.s32 1, %s3
  %s6 = scalar_select 0, %s5, %s3
  $region1: #{test_model_forward.1} parent=0
    #allocation2 [shape = 'u8[466944]{0}', space=vmem, size = 0x72000, scoped, tag = 'input window, operand 1, single buffered']
    #allocation3 [shape = 's32[1]{0}', space=sflag, size = 0x4, scoped, tag = 'scoped memory for test_model_forward.1']
    #allocation4 [shape = 's32[1]{0}', space=sflag, size = 0x4, scoped, tag = 'scoped memory for test_model_forward.1']
    #allocation5 [shape = 'u8[3072]{0}', space=vmem, size = 0xc00, scoped, tag = 'output window, operand 0, single buffered']
    %7 = vsyncpa [#allocation3], 0
    %8 = vsyncpa [#allocation4], 0
    // Predicated region
    $region2: #{test_model_forward.1} parent=1 // pred_check
      _
    $region3: #{test_model_forward.1} parent=1 // pred_check_branch
      %10 = sbr.rel (0) target = $region5
    $region4: #{test_model_forward.1} parent=1 // pred_region
      _
    $region5: #{test_model_forward.1} parent=1 // pred_fallthru
      _
    // Predicated region
    $region6: #{test_model_forward.1} parent=1 // pred_check
      _
    $region7: #{test_model_forward.1} parent=1 // pred_check_branch
      %12 = sbr.rel (0) target = $region9
    $region8: #{test_model_forward.1} parent=1 // pred_region
      %s14 = ssub.s32 14592, 14592
      %15 = vsyncadd [#allocation3], %s14
      %s16 = sshll.u32 [#allocation2], 4
      %s17 = int_to_ptr.vmem [resolvable:$true] %s16
      %22 = dma.hbm_to_vmem [thread:$0]  %s1, 14592, %s17, [#allocation3], 384, 384, 24
    $region9: #{test_model_forward.1} parent=1 // pred_fallthru
      _
    // Predicated region
    $region10: #{test_model_forward.1} parent=1 // pred_check
      _
    $region11: #{test_model_forward.1} parent=1 // pred_check_branch
      %24 = sbr.rel (0) target = $region13
    $region12: #{test_model_forward.1} parent=1 // pred_region
      %25 = dma.done [#allocation3], 14592
    $region13: #{test_model_forward.1} parent=1 // pred_fallthru
      _
    %v26 = vld [vmem:[%s0] sm:$0x3f]
    %v27 = vadd.f32 %v26, 1.0
    %v28 = vld [vmem:[#allocation2] sm:$0xff]
    %v29 = vld [vmem:[#allocation2 + $0x8] sm:$0xff]
    %v30 = vld [vmem:[#allocation2 + $0x10] sm:$0xff]
    %v31 = vld [vmem:[#allocation2 + $0x18] sm:$0xff]
    %v32 = vld [vmem:[#allocation2 + $0x20] sm:$0xff]
    %v33 = vld [vmem:[#allocation2 + $0x28] sm:$0xff]
    %v34 = vld [vmem:[#allocation2 + $0x30] sm:$0xff]
    %v35 = vld [vmem:[#allocation2 + $0x38] sm:$0xff]
    %v36 = vld [vmem:[#allocation2 + $0x40] sm:$0xff]
    %v37 = vld [vmem:[#allocation2 + $0x48] sm:$0xff]
    %v38 = vld [vmem:[#allocation2 + $0x50] sm:$0xff]
    %v39 = vld [vmem:[#allocation2 + $0x58] sm:$0xff]
    %v40 = vld [vmem:[#allocation2 + $0x60] sm:$0xff]
    %v41 = vld [vmem:[#allocation2 + $0x68] sm:$0xff]
    %v42 = vld [vmem:[#allocation2 + $0x70] sm:$0xff]
    %v43 = vld [vmem:[#allocation2 + $0x78] sm:$0xff]
    %v44 = vld [vmem:[#allocation2 + $0x80] sm:$0xff]
    %v45 = vld [vmem:[#allocation2 + $0x88] sm:$0xff]
    %v46 = vld [vmem:[#allocation2 + $0x90] sm:$0xff]
    %v47 = vld [vmem:[#allocation2 + $0x98] sm:$0xff]
    %v48 = vld [vmem:[#allocation2 + $0xa0] sm:$0xff]
    %v49 = vld [vmem:[#allocation2 + $0xa8] sm:$0xff]
    %v50 = vld [vmem:[#allocation2 + $0xb0] sm:$0xff]
    %v51 = vld [vmem:[#allocation2 + $0xb8] sm:$0xff]
    %v52 = vld [vmem:[#allocation2 + $0xc0] sm:$0xff]
    %v53 = vld [vmem:[#allocation2 + $0xc8] sm:$0xff]
    %v54 = vld [vmem:[#allocation2 + $0xd0] sm:$0xff]
    %v55 = vld [vmem:[#allocation2 + $0xd8] sm:$0xff]
    %v56 = vld [vmem:[#allocation2 + $0xe0] sm:$0xff]
    %v57 = vld [vmem:[#allocation2 + $0xe8] sm:$0xff]
    %v58 = vld [vmem:[#allocation2 + $0xf0] sm:$0xff]
    %v59 = vld [vmem:[#allocation2 + $0xf8] sm:$0xff]
    %v60 = vld [vmem:[#allocation2 + $0x100] sm:$0xff]
    %v61 = vld [vmem:[#allocation2 + $0x108] sm:$0xff]
    %v62 = vld [vmem:[#allocation2 + $0x110] sm:$0xff]
    %v63 = vld [vmem:[#allocation2 + $0x118] sm:$0xff]
    %v64 = vld [vmem:[#allocation2 + $0x120] sm:$0xff]
    %v65 = vld [vmem:[#allocation2 + $0x128] sm:$0xff]
    %v66 = vld [vmem:[#allocation2 + $0x130] sm:$0xff]
    %v67 = vld [vmem:[#allocation2 + $0x138] sm:$0xff]
    %v68 = vld [vmem:[#allocation2 + $0x140] sm:$0xff]
    %v69 = vld [vmem:[#allocation2 + $0x148] sm:$0xff]
    %v70 = vld [vmem:[#allocation2 + $0x150] sm:$0xff]
    %v71 = vld [vmem:[#allocation2 + $0x158] sm:$0xff]
    %v72 = vld [vmem:[#allocation2 + $0x160] sm:$0xff]
    %v73 = vld [vmem:[#allocation2 + $0x168] sm:$0xff]
    %v74 = vld [vmem:[#allocation2 + $0x170] sm:$0xff]
    %v75 = vld [vmem:[#allocation2 + $0x178] sm:$0xff]
    %v76 = vld [vmem:[#allocation2 + $0x180] sm:$0xff]
    %v77 = vld [vmem:[#allocation2 + $0x188] sm:$0xff]
    %v78 = vld [vmem:[#allocation2 + $0x190] sm:$0xff]
    %v79 = vld [vmem:[#allocation2 + $0x198] sm:$0xff]
    %v80 = vld [vmem:[#allocation2 + $0x1a0] sm:$0xff]
    %v81 = vld [vmem:[#allocation2 + $0x1a8] sm:$0xff]
    %v82 = vld [vmem:[#allocation2 + $0x1b0] sm:$0xff]
    %v83 = vld [vmem:[#allocation2 + $0x1b8] sm:$0xff]
    %v84 = vld [vmem:[#allocation2 + $0x1c0] sm:$0xff]
    %v85 = vld [vmem:[#allocation2 + $0x1c8] sm:$0xff]
    %v86 = vld [vmem:[#allocation2 + $0x1d0] sm:$0xff]
    %v87 = vld [vmem:[#allocation2 + $0x1d8] sm:$0xff]
    %v88 = vld [vmem:[#allocation2 + $0x1e0] sm:$0xff]
    %v89 = vld [vmem:[#allocation2 + $0x1e8] sm:$0xff]
    %v90 = vld [vmem:[#allocation2 + $0x1f0] sm:$0xff]
    %v91 = vld [vmem:[#allocation2 + $0x1f8] sm:$0xff]
    %v92 = vld [vmem:[#allocation2 + $0x200] sm:$0xff]
    %v93 = vld [vmem:[#allocation2 + $0x208] sm:$0xff]
    %v94 = vld [vmem:[#allocation2 + $0x210] sm:$0xff]
    %v95 = vld [vmem:[#allocation2 + $0x218] sm:$0xff]
    %v96 = vld [vmem:[#allocation2 + $0x220] sm:$0xff]
    %v97 = vld [vmem:[#allocation2 + $0x228] sm:$0xff]
    %v98 = vld [vmem:[#allocation2 + $0x230] sm:$0xff]
    %v99 = vld [vmem:[#allocation2 + $0x238] sm:$0xff]
    %v100 = vld [vmem:[#allocation2 + $0x240] sm:$0xff]
    %v101 = vld [vmem:[#allocation2 + $0x248] sm:$0xff]
    %v102 = vld [vmem:[#allocation2 + $0x250] sm:$0xff]
    %v103 = vld [vmem:[#allocation2 + $0x258] sm:$0xff]
    %v104 = vld [vmem:[#allocation2 + $0x260] sm:$0xff]
    %v105 = vld [vmem:[#allocation2 + $0x268] sm:$0xff]
    %v106 = vld [vmem:[#allocation2 + $0x270] sm:$0xff]
    %v107 = vld [vmem:[#allocation2 + $0x278] sm:$0xff]
    %v108 = vld [vmem:[#allocation2 + $0x280] sm:$0xff]
    %v109 = vld [vmem:[#allocation2 + $0x288] sm:$0xff]
    %v110 = vld [vmem:[#allocation2 + $0x290] sm:$0xff]
    %v111 = vld [vmem:[#allocation2 + $0x298] sm:$0xff]
    %v112 = vld [vmem:[#allocation2 + $0x2a0] sm:$0xff]
    %v113 = vld [vmem:[#allocation2 + $0x2a8] sm:$0xff]
    %v114 = vld [vmem:[#allocation2 + $0x2b0] sm:$0xff]
    %v115 = vld [vmem:[#allocation2 + $0x2b8] sm:$0xff]
    %v116 = vld [vmem:[#allocation2 + $0x2c0] sm:$0xff]
    %v117 = vld [vmem:[#allocation2 + $0x2c8] sm:$0xff]
    %v118 = vld [vmem:[#allocation2 + $0x2d0] sm:$0xff]
    %v119 = vld [vmem:[#allocation2 + $0x2d8] sm:$0xff]
    %v120 = vld [vmem:[#allocation2 + $0x2e0] sm:$0xff]
    %v121 = vld [vmem:[#allocation2 + $0x2e8] sm:$0xff]
    %v122 = vld [vmem:[#allocation2 + $0x2f0] sm:$0xff]
    %v123 = vld [vmem:[#allocation2 + $0x2f8] sm:$0xff]
    %v124 = vld [vmem:[#allocation2 + $0x300] sm:$0xff]
    %v125 = vld [vmem:[#allocation2 + $0x308] sm:$0xff]
    %v126 = vld [vmem:[#allocation2 + $0x310] sm:$0xff]
    %v127 = vld [vmem:[#allocation2 + $0x318] sm:$0xff]
    %v128 = vld [vmem:[#allocation2 + $0x320] sm:$0xff]
    %v129 = vld [vmem:[#allocation2 + $0x328] sm:$0xff]
    %v130 = vld [vmem:[#allocation2 + $0x330] sm:$0xff]
    %v131 = vld [vmem:[#allocation2 + $0x338] sm:$0xff]
    %v132 = vld [vmem:[#allocation2 + $0x340] sm:$0xff]
    %v133 = vld [vmem:[#allocation2 + $0x348] sm:$0xff]
    %v134 = vld [vmem:[#allocation2 + $0x350] sm:$0xff]
    %v135 = vld [vmem:[#allocation2 + $0x358] sm:$0xff]
    %v136 = vld [vmem:[#allocation2 + $0x360] sm:$0xff]
    %v137 = vld [vmem:[#allocation2 + $0x368] sm:$0xff]
    %v138 = vld [vmem:[#allocation2 + $0x370] sm:$0xff]
    %v139 = vld [vmem:[#allocation2 + $0x378] sm:$0xf]
    %v140 = vld [vmem:[#allocation2 + $0x380] sm:$0xf]
    %v141 = vld [vmem:[#allocation2 + $0x388] sm:$0xf]
    %v143 = vcombine.high %v27, %v27
    %v145 = vunpack.c.l.s4 1983009808
    %v146 = vunpack.c.0.s8 %v145
    %v147 = vlaneseq
    %v148 = vshrl.u32 %v147, 7
    %v149 = vsub.s32 %v146, %v148
    %v150 = vrot.slane %v27, %v149
    %v152 = vunpack.c.l.s4 1983009808
    %v153 = vunpack.c.0.s8 %v152
    %v154 = vlaneseq
    %v155 = vshrl.u32 %v154, 7
    %v156 = vsub.s32 %v153, %v155
    %v157 = vrot.slane %v143, %v156
    %v158 = vcombine.high %v150, %v150
    %vm161 = vcmask 359424
    %v162 = vsel %vm161, %v157, 0
    %vm164 = vcmask 1043456
    %v166 = vsel %vm164, %v139, 0
    %v169 = vsel %vm164, %v140, 0
    %v172 = vsel %vm164, %v141, 0
    %174 = vmatprep.subr.mxu0 %v74
    %175 = vmatpush1.msra.mxu0 %v73
    %176 = vmatprep.subr.mxu0 %v71
    %177 = vmatpush1.msra.mxu0 %v70
    %178 = vmatprep.subr.mxu0 %v68
    %179 = vmatpush1.msra.mxu0 %v67
    %180 = vmatprep.subr.mxu0 %v65
    %181 = vmatpush1.msra.mxu0 %v64
    %182 = vmatprep.subr.mxu0 %v62
    %183 = vmatpush1.msra.mxu0 %v61
    %184 = vmatprep.subr.mxu0 %v59
    %185 = vmatpush1.msra.mxu0 %v58
    %186 = vmatprep.subr.mxu0 %v56
    %187 = vmatpush1.msra.mxu0 %v55
    %188 = vmatprep.subr.mxu0 %v53
    %189 = vmatpush1.msra.mxu0 %v52
    %190 = vmatprep.subr.mxu0 %v50
    %191 = vmatpush1.msra.mxu0 %v49
    %192 = vmatprep.subr.mxu0 %v47
    %193 = vmatpush1.msra.mxu0 %v46
    %194 = vmatprep.subr.mxu0 %v44
    %195 = vmatpush1.msra.mxu0 %v43
    %196 = vmatprep.subr.mxu0 %v41
    %197 = vmatpush1.msra.mxu0 %v40
    %198 = vmatprep.subr.mxu0 %v38
    %199 = vmatpush1.msra.mxu0 %v37
    %200 = vmatprep.subr.mxu0 %v35
    %201 = vmatpush1.msra.mxu0 %v34
    %202 = vmatprep.subr.mxu0 %v32
    %203 = vmatpush1.msra.mxu0 %v31
    %204 = vmatprep.subr.mxu0 %v29
    %205 = vmatpush1.msra.mxu0 %v28
    %206 = vmatprep.subr.mxu0 %v122
    %207 = vmatpush2.msra.mxu0 %v121
    %208 = vmatprep.subr.mxu0 %v119
    %209 = vmatpush2.msra.mxu0 %v118
    %210 = vmatprep.subr.mxu0 %v116
    %211 = vmatpush2.msra.mxu0 %v115
    %212 = vmatprep.subr.mxu0 %v113
    %213 = vmatpush2.msra.mxu0 %v112
    %214 = vmatprep.subr.mxu0 %v110
    %215 = vmatpush2.msra.mxu0 %v109
    %216 = vmatprep.subr.mxu0 %v107
    %217 = vmatpush2.msra.mxu0 %v106
    %218 = vmatprep.subr.mxu0 %v104
    %219 = vmatpush2.msra.mxu0 %v103
    %220 = vmatprep.subr.mxu0 %v101
    %221 = vmatpush2.msra.mxu0 %v100
    %222 = vmatprep.subr.mxu0 %v98
    %223 = vmatpush2.msra.mxu0 %v97
    %224 = vmatprep.subr.mxu0 %v95
    %225 = vmatpush2.msra.mxu0 %v94
    %226 = vmatprep.subr.mxu0 %v92
    %227 = vmatpush2.msra.mxu0 %v91
    %228 = vmatprep.subr.mxu0 %v89
    %229 = vmatpush2.msra.mxu0 %v88
    %230 = vmatprep.subr.mxu0 %v86
    %231 = vmatpush2.msra.mxu0 %v85
    %232 = vmatprep.subr.mxu0 %v83
    %233 = vmatpush2.msra.mxu0 %v82
    %234 = vmatprep.subr.mxu0 %v80
    %235 = vmatpush2.msra.mxu0 %v79
    %236 = vmatprep.subr.mxu0 %v77
    %237 = vmatpush2.msra.mxu0 %v76
    %238 = vmatprep.mubr.f32.mxu0 %v158
    %239 = vmatmul.mubr.f32.gmra.mxu0 %v150
    %v240 = vpop.f32.mrf.mxu0
    %v241 = vadd.f32 0.0, %v240
    %v242 = vpop.f32.mrf.mxu0
    %v243 = vadd.f32 0.0, %v242
    %244 = vdwg.mxu0
    %245 = vmatprep.subr.mxu0 0.0
    %246 = vmatpush1.msra.mxu0 0.0
    %247 = vmatprep.subr.mxu0 0.0
    %248 = vmatpush1.msra.mxu0 0.0
    %249 = vmatprep.subr.mxu0 0.0
    %250 = vmatpush1.msra.mxu0 0.0
    %251 = vmatprep.subr.mxu0 0.0
    %252 = vmatpush1.msra.mxu0 0.0
    %253 = vmatprep.subr.mxu0 0.0
    %254 = vmatpush1.msra.mxu0 0.0
    %255 = vmatprep.subr.mxu0 0.0
    %256 = vmatpush1.msra.mxu0 0.0
    %257 = vmatprep.subr.mxu0 0.0
    %258 = vmatpush1.msra.mxu0 0.0
    %259 = vmatprep.subr.mxu0 0.0
    %260 = vmatpush1.msra.mxu0 0.0
    %261 = vmatprep.subr.mxu0 0.0
    %262 = vmatpush1.msra.mxu0 0.0
    %263 = vmatprep.subr.mxu0 0.0
    %264 = vmatpush1.msra.mxu0 0.0
    %265 = vmatprep.subr.mxu0 %v169
    %266 = vmatpush1.msra.mxu0 %v166
    %267 = vmatprep.subr.mxu0 %v137
    %268 = vmatpush1.msra.mxu0 %v136
    %269 = vmatprep.subr.mxu0 %v134
    %270 = vmatpush1.msra.mxu0 %v133
    %271 = vmatprep.subr.mxu0 %v131
    %272 = vmatpush1.msra.mxu0 %v130
    %273 = vmatprep.subr.mxu0 %v128
    %274 = vmatpush1.msra.mxu0 %v127
    %275 = vmatprep.subr.mxu0 %v125
    %276 = vmatpush1.msra.mxu0 %v124
    %277 = vmatprep.subr.mxu0 0.0
    %278 = vmatpush2.msra.mxu0 0.0
    %279 = vmatprep.subr.mxu0 0.0
    %280 = vmatpush2.msra.mxu0 0.0
    %281 = vmatprep.subr.mxu0 0.0
    %282 = vmatpush2.msra.mxu0 0.0
    %283 = vmatprep.subr.mxu0 0.0
    %284 = vmatpush2.msra.mxu0 0.0
    %285 = vmatprep.subr.mxu0 0.0
    %286 = vmatpush2.msra.mxu0 0.0
    %287 = vmatprep.subr.mxu0 0.0
    %288 = vmatpush2.msra.mxu0 0.0
    %289 = vmatprep.subr.mxu0 0.0
    %290 = vmatpush2.msra.mxu0 0.0
    %291 = vmatprep.subr.mxu0 0.0
    %292 = vmatpush2.msra.mxu0 0.0
    %293 = vmatprep.subr.mxu0 0.0
    %294 = vmatpush2.msra.mxu0 0.0
    %295 = vmatprep.subr.mxu0 0.0
    %296 = vmatpush2.msra.mxu0 0.0
    %297 = vmatprep.subr.mxu0 0.0
    %298 = vmatpush2.msra.mxu0 0.0
    %299 = vmatprep.subr.mxu0 0.0
    %300 = vmatpush2.msra.mxu0 0.0
    %301 = vmatprep.subr.mxu0 0.0
    %302 = vmatpush2.msra.mxu0 0.0
    %303 = vmatprep.subr.mxu0 0.0
    %304 = vmatpush2.msra.mxu0 0.0
    %305 = vmatprep.subr.mxu0 0.0
    %306 = vmatpush2.msra.mxu0 0.0
    %307 = vmatprep.subr.mxu0 0.0
    %308 = vmatpush2.msra.mxu0 0.0
    %309 = vmatprep.mubr.f32.mxu0 0.0
    %310 = vmatmul.mubr.f32.gmra.mxu0 %v162
    %v311 = vpop.f32.mrf.mxu0
    %v312 = vadd.f32 %v241, %v311
    %v313 = vpop.f32.mrf.mxu0
    %v314 = vadd.f32 %v243, %v313
    %315 = vdwg.mxu0
    %316 = vmatprep.subr.mxu0 0.0
    %317 = vmatpush1.msra.mxu0 %v75
    %318 = vmatprep.subr.mxu0 0.0
    %319 = vmatpush1.msra.mxu0 %v72
    %320 = vmatprep.subr.mxu0 0.0
    %321 = vmatpush1.msra.mxu0 %v69
    %322 = vmatprep.subr.mxu0 0.0
    %323 = vmatpush1.msra.mxu0 %v66
    %324 = vmatprep.subr.mxu0 0.0
    %325 = vmatpush1.msra.mxu0 %v63
    %326 = vmatprep.subr.mxu0 0.0
    %327 = vmatpush1.msra.mxu0 %v60
    %328 = vmatprep.subr.mxu0 0.0
    %329 = vmatpush1.msra.mxu0 %v57
    %330 = vmatprep.subr.mxu0 0.0
    %331 = vmatpush1.msra.mxu0 %v54
    %332 = vmatprep.subr.mxu0 0.0
    %333 = vmatpush1.msra.mxu0 %v51
    %334 = vmatprep.subr.mxu0 0.0
    %335 = vmatpush1.msra.mxu0 %v48
    %336 = vmatprep.subr.mxu0 0.0
    %337 = vmatpush1.msra.mxu0 %v45
    %338 = vmatprep.subr.mxu0 0.0
    %339 = vmatpush1.msra.mxu0 %v42
    %340 = vmatprep.subr.mxu0 0.0
    %341 = vmatpush1.msra.mxu0 %v39
    %342 = vmatprep.subr.mxu0 0.0
    %343 = vmatpush1.msra.mxu0 %v36
    %344 = vmatprep.subr.mxu0 0.0
    %345 = vmatpush1.msra.mxu0 %v33
    %346 = vmatprep.subr.mxu0 0.0
    %347 = vmatpush1.msra.mxu0 %v30
    %348 = vmatprep.subr.mxu0 0.0
    %349 = vmatpush2.msra.mxu0 %v123
    %350 = vmatprep.subr.mxu0 0.0
    %351 = vmatpush2.msra.mxu0 %v120
    %352 = vmatprep.subr.mxu0 0.0
    %353 = vmatpush2.msra.mxu0 %v117
    %354 = vmatprep.subr.mxu0 0.0
    %355 = vmatpush2.msra.mxu0 %v114
    %356 = vmatprep.subr.mxu0 0.0
    %357 = vmatpush2.msra.mxu0 %v111
    %358 = vmatprep.subr.mxu0 0.0
    %359 = vmatpush2.msra.mxu0 %v108
    %360 = vmatprep.subr.mxu0 0.0
    %361 = vmatpush2.msra.mxu0 %v105
    %362 = vmatprep.subr.mxu0 0.0
    %363 = vmatpush2.msra.mxu0 %v102
    %364 = vmatprep.subr.mxu0 0.0
    %365 = vmatpush2.msra.mxu0 %v99
    %366 = vmatprep.subr.mxu0 0.0
    %367 = vmatpush2.msra.mxu0 %v96
    %368 = vmatprep.subr.mxu0 0.0
    %369 = vmatpush2.msra.mxu0 %v93
    %370 = vmatprep.subr.mxu0 0.0
    %371 = vmatpush2.msra.mxu0 %v90
    %372 = vmatprep.subr.mxu0 0.0
    %373 = vmatpush2.msra.mxu0 %v87
    %374 = vmatprep.subr.mxu0 0.0
    %375 = vmatpush2.msra.mxu0 %v84
    %376 = vmatprep.subr.mxu0 0.0
    %377 = vmatpush2.msra.mxu0 %v81
    %378 = vmatprep.subr.mxu0 0.0
    %379 = vmatpush2.msra.mxu0 %v78
    %380 = vmatprep.mubr.f32.mxu0 %v158
    %381 = vmatmul.mubr.f32.gmra.mxu0 %v150
    %v382 = vpop.f32.mrf.mxu0
    %v383 = vadd.f32 0.0, %v382
    %v384 = vpop.f32.mrf.mxu0
    %385 = vdwg.mxu0
    %386 = vmatprep.subr.mxu0 0.0
    %387 = vmatpush1.msra.mxu0 0.0
    %388 = vmatprep.subr.mxu0 0.0
    %389 = vmatpush1.msra.mxu0 0.0
    %390 = vmatprep.subr.mxu0 0.0
    %391 = vmatpush1.msra.mxu0 0.0
    %392 = vmatprep.subr.mxu0 0.0
    %393 = vmatpush1.msra.mxu0 0.0
    %394 = vmatprep.subr.mxu0 0.0
    %395 = vmatpush1.msra.mxu0 0.0
    %396 = vmatprep.subr.mxu0 0.0
    %397 = vmatpush1.msra.mxu0 0.0
    %398 = vmatprep.subr.mxu0 0.0
    %399 = vmatpush1.msra.mxu0 0.0
    %400 = vmatprep.subr.mxu0 0.0
    %401 = vmatpush1.msra.mxu0 0.0
    %402 = vmatprep.subr.mxu0 0.0
    %403 = vmatpush1.msra.mxu0 0.0
    %404 = vmatprep.subr.mxu0 0.0
    %405 = vmatpush1.msra.mxu0 0.0
    %406 = vmatprep.subr.mxu0 0.0
    %407 = vmatpush1.msra.mxu0 %v172
    %408 = vmatprep.subr.mxu0 0.0
    %409 = vmatpush1.msra.mxu0 %v138
    %410 = vmatprep.subr.mxu0 0.0
    %411 = vmatpush1.msra.mxu0 %v135
    %412 = vmatprep.subr.mxu0 0.0
    %413 = vmatpush1.msra.mxu0 %v132
    %414 = vmatprep.subr.mxu0 0.0
    %415 = vmatpush1.msra.mxu0 %v129
    %416 = vmatprep.subr.mxu0 0.0
    %417 = vmatpush1.msra.mxu0 %v126
    %418 = vmatprep.subr.mxu0 0.0
    %419 = vmatpush2.msra.mxu0 0.0
    %420 = vmatprep.subr.mxu0 0.0
    %421 = vmatpush2.msra.mxu0 0.0
    %422 = vmatprep.subr.mxu0 0.0
    %423 = vmatpush2.msra.mxu0 0.0
    %424 = vmatprep.subr.mxu0 0.0
    %425 = vmatpush2.msra.mxu0 0.0
    %426 = vmatprep.subr.mxu0 0.0
    %427 = vmatpush2.msra.mxu0 0.0
    %428 = vmatprep.subr.mxu0 0.0
    %429 = vmatpush2.msra.mxu0 0.0
    %430 = vmatprep.subr.mxu0 0.0
    %431 = vmatpush2.msra.mxu0 0.0
    %432 = vmatprep.subr.mxu0 0.0
    %433 = vmatpush2.msra.mxu0 0.0
    %434 = vmatprep.subr.mxu0 0.0
    %435 = vmatpush2.msra.mxu0 0.0
    %436 = vmatprep.subr.mxu0 0.0
    %437 = vmatpush2.msra.mxu0 0.0
    %438 = vmatprep.subr.mxu0 0.0
    %439 = vmatpush2.msra.mxu0 0.0
    %440 = vmatprep.subr.mxu0 0.0
    %441 = vmatpush2.msra.mxu0 0.0
    %442 = vmatprep.subr.mxu0 0.0
    %443 = vmatpush2.msra.mxu0 0.0
    %444 = vmatprep.subr.mxu0 0.0
    %445 = vmatpush2.msra.mxu0 0.0
    %446 = vmatprep.subr.mxu0 0.0
    %447 = vmatpush2.msra.mxu0 0.0
    %448 = vmatprep.subr.mxu0 0.0
    %449 = vmatpush2.msra.mxu0 0.0
    %450 = vmatprep.mubr.f32.mxu0 0.0
    %451 = vmatmul.mubr.f32.gmra.mxu0 %v162
    %v452 = vpop.f32.mrf.mxu0
    %v453 = vadd.f32 %v383, %v452
    %v454 = vpop.f32.mrf.mxu0
    %455 = vdwg.mxu0
    %v459 = vcombine.low %v312, %v314
    %v461 = vunpack.c.l.s4 1983009808
    %v462 = vunpack.c.0.s8 %v461
    %v463 = vlaneseq
    %v464 = vshrl.u32 %v463, 7
    %v465 = vsub.s32 %v462, %v464
    %v466 = vrot.slane %v459, %v465
    %v468 = vunpack.c.l.s4 1983009808
    %v469 = vunpack.c.0.s8 %v468
    %v470 = vlaneseq
    %v471 = vshrl.u32 %v470, 7
    %v472 = vsub.s32 %v469, %v471
    %v473 = vrot.slane %v453, %v472
    %v474 = vcombine.low %v466, %v473
    %vm476 = vcmask 1041408
    %vm477 = vcmask 1043458
    %vm478 = vmor %vm477, %vm476
    %vm479 = vcmask 357380
    %vm480 = vmor %vm479, %vm478
    %481 = vst.msk [vmem:[#allocation5] sm:$0x3f] %vm480, %v474
    // Predicated region
    $region14: #{test_model_forward.1} parent=1 // pred_check
      _
    $region15: #{test_model_forward.1} parent=1 // pred_check_branch
      %483 = sbr.rel (0) target = $region17
    $region16: #{test_model_forward.1} parent=1 // pred_region
      %s485 = ssub.s32 96, 96
      %486 = vsyncadd [#allocation4], %s485
      %s488 = sshll.u32 [#allocation5], 4
      %s489 = int_to_ptr.vmem [resolvable:$true] %s488
      %491 = dma.vmem_to_hbm [thread:$0]  %s489, 96, %s2, [#allocation4]
    $region17: #{test_model_forward.1} parent=1 // pred_fallthru
      _
    // Predicated region
    $region18: #{test_model_forward.1} parent=1 // pred_check
      _
    $region19: #{test_model_forward.1} parent=1 // pred_check_branch
      %493 = sbr.rel (0) target = $region21
    $region20: #{test_model_forward.1} parent=1 // pred_region
      %494 = dma.done [#allocation4], 96
    $region21: #{test_model_forward.1} parent=1 // pred_fallthru
      _
    %495 = vsyncpa [#allocation3], 1
    %496 = vsyncpa [#allocation4], 1

</llo_original>
